<compile_context>
chip_gen: v5e
topology: v5e:2x2
jax: 0.10.0
libtpu: 0.0.40
codegen_flags: <defaults>
</compile_context>

<pallas_src>
import functools

import jax
import jax.numpy as jnp
from jax.experimental import pallas as pl
from jax.experimental.pallas import tpu as pltpu


# ---------------------------------------------------------------------------
# Tiling parameters (memory-bound elementwise op).
# ---------------------------------------------------------------------------
_TILE_BYTES = 8 << 20          # ~8 MiB per input tile; x2 arrays x2 buffers
                               # ~= 32 MiB working set -> fits v7x (64 MiB
                               # physical) and v5e/v6e (128 MiB physical).
_VMEM_LIMIT_BYTES = 40 << 20   # raise past scoped defaults (16 MiB on v5e,
                               # 32 MiB on v6e/v7x) to admit the 32 MiB set.
_JNP_FALLBACK_ELEMS = 1024     # below one vreg a pallas launch is pure
                               # overhead; plain XLA elementwise is faster.


def _choose_lane(total):
    """Largest lane-dense (multiple-of-128) last dim that divides `total`."""
    for lane in (2048, 1024, 512, 256, 128):
        if total % lane == 0:
            return lane
    return 128


def _apply_chain(x, activations, out_dtype):
    """Statically-known activation chain, applied elementwise."""
    for act in activations:
        if act == "relu":
            x = jnp.maximum(x, jnp.zeros_like(x))
        elif act == "sigmoid":
            # Exact sigmoid: exp runs on the EUP slot, the divide on the VALU;
            # both are hidden under HBM traffic for this DMA-bound kernel.
            xf = x.astype(jnp.float32)
            x = (1.0 / (1.0 + jnp.exp(-xf))).astype(out_dtype)
        # else: unknown entry -> identity (cannot happen; chain is validated)
    return x


def _activation_kernel(x_ref, o_ref, *, activations):
    o_ref[...] = _apply_chain(x_ref[...], activations, o_ref.dtype)


def _forward_lane_dense(x, activations):
    """Fast path: element count divisible by 128 -> flat (rows, lane) layout."""
    n, c, h, w = x.shape
    total = n * c * h * w
    lane = _choose_lane(total)
    rows = total // lane
    x2d = x.reshape(rows, lane)            # row-major reshape: no data movement

    itemsize = x.dtype.itemsize
    sub_mult = 8 * max(1, 4 // itemsize)   # f32: 8, bf16: 16, int8/fp8: 32
    tile_rows = (_TILE_BYTES // (lane * itemsize)) // sub_mult * sub_mult
    tile_rows = max(sub_mult, tile_rows)
    tile_rows = min(tile_rows, rows)       # full extent is exempt from (8,128)
    grid = (pl.cdiv(rows, tile_rows),)

    kernel = functools.partial(_activation_kernel, activations=activations)
    y2d = pl.pallas_call(
        kernel,
        out_shape=jax.ShapeDtypeStruct(x2d.shape, x2d.dtype),
        grid=grid,
        in_specs=[pl.BlockSpec((tile_rows, lane), lambda i: (i, 0))],
        out_specs=pl.BlockSpec((tile_rows, lane), lambda i: (i, 0)),
        compiler_params=pltpu.CompilerParams(
            # Independent tiles; on v7x this lets the grid shard across the
            # two TensorCores.  Near-zero effect on single-TC v5e/v6e.
            dimension_semantics=("parallel",),
            vmem_limit_bytes=_VMEM_LIMIT_BYTES,
        ),
    )(x2d)
    return y2d.reshape(n, c, h, w)


def _forward_nchw(x, activations):
    """Odd-size path: keep NCHW, block with full-extent (H, W) last dims.

    Avoids the previous pad + slice round trips (each a full HBM pass); the
    only cost is masked stores when W < 128, and it stays a 2-pass op.
    """
    n, c, h, w = x.shape
    itemsize = x.dtype.itemsize
    hw_bytes = h * w * itemsize
    if hw_bytes > _TILE_BYTES:
        # TODO(synk): huge non-128-divisible spatial planes; plain XLA
        # elementwise is already bandwidth-optimal here, so fall back.
        return _apply_chain(x, activations, x.dtype)

    bc = max(1, min(c, _TILE_BYTES // hw_bytes))
    grid = (n, pl.cdiv(c, bc))
    kernel = functools.partial(_activation_kernel, activations=activations)
    return pl.pallas_call(
        kernel,
        out_shape=jax.ShapeDtypeStruct(x.shape, x.dtype),
        grid=grid,
        in_specs=[pl.BlockSpec((1, bc, h, w), lambda i, j: (i, j, 0, 0))],
        out_specs=pl.BlockSpec((1, bc, h, w), lambda i, j: (i, j, 0, 0)),
        compiler_params=pltpu.CompilerParams(
            dimension_semantics=("parallel", "parallel"),
            vmem_limit_bytes=_VMEM_LIMIT_BYTES,
        ),
    )(x)


@functools.partial(jax.jit, static_argnames=("activations",))
def _conv_block_forward(x, activations):
    """Fused elementwise activation chain over an NCHW tensor."""
    total = x.size
    if total < _JNP_FALLBACK_ELEMS:
        # Tiny tensors: launch overhead dominates ~KiB of HBM traffic.
        return _apply_chain(x, activations, x.dtype)
    if total % 128 == 0:
        return _forward_lane_dense(x, activations)
    return _forward_nchw(x, activations)


class ConvBlockPallas:
    """Pallas equivalent of _ConvBlock.

    Mirrors the PyTorch class: in_channels/out_channels/kernel_size/bn are
    accepted but unused (the reference __init__ never builds a conv or bn).
    Call add_activation() to append the activation, matching the reference.
    """

    def __init__(self, in_channels, out_channels, kernel_size,
                 bn=False, activation=None):
        del in_channels, out_channels, kernel_size, bn  # unused, as in reference
        self.activation = activation
        self._applied = []  # mirrors nn.ModuleList contents

    def add_activation(self):
        if self.activation == "relu":
            self._applied.append("relu")
        elif self.activation == "sigmoid":
            self._applied.append("sigmoid")
        # else: pass (matches reference)

    def __call__(self, x):
        # Identity path: empty ModuleList -> no kernel launch, no HBM traffic.
        if not self._applied:
            return x
        return _conv_block_forward(x, tuple(self._applied))


if __name__ == "__main__":
    key = jax.random.PRNGKey(0)
    x = jax.random.normal(key, (2, 4, 16, 16), dtype=jnp.float32)  # NCHW

    # Case 1: default (no add_activation called) -> identity (no kernel)
    blk_id = ConvBlockPallas(4, 4, 3)
    y_id = jax.block_until_ready(blk_id(x))
    assert jnp.allclose(y_id, x), "identity path mismatch"

    # Case 2: relu (lane-dense pallas path)
    blk_relu = ConvBlockPallas(4, 4, 3, activation="relu")
    blk_relu.add_activation()
    y_relu = jax.block_until_ready(blk_relu(x))
    assert jnp.allclose(y_relu, jnp.maximum(x, 0.0)), "relu path mismatch"

    # Case 3: sigmoid (lane-dense pallas path)
    blk_sig = ConvBlockPallas(4, 4, 3, activation="sigmoid")
    blk_sig.add_activation()
    y_sig = jax.block_until_ready(blk_sig(x))
    assert jnp.allclose(y_sig, jax.nn.sigmoid(x), atol=1e-6), "sigmoid path mismatch"

    # Case 4: exercise the multi-tile grid path (> one 8 MiB tile).
    x_big = jax.random.normal(jax.random.PRNGKey(1), (4, 16, 256, 256),
                              dtype=jnp.float32)
    blk_relu2 = ConvBlockPallas(16, 16, 3, activation="relu")
    blk_relu2.add_activation()
    y_big = jax.block_until_ready(blk_relu2(x_big))
    assert jnp.allclose(y_big, jnp.maximum(x_big, 0.0)), "tiled relu mismatch"

    # Case 5: odd element count (not a multiple of 128) -> NCHW-blocked path.
    x_odd = jax.random.normal(jax.random.PRNGKey(2), (2, 3, 7, 7),
                              dtype=jnp.float32)
    blk_sig2 = ConvBlockPallas(3, 3, 3, activation="sigmoid")
    blk_sig2.add_activation()
    y_odd = jax.block_until_ready(blk_sig2(x_odd))
    assert jnp.allclose(y_odd, jax.nn.sigmoid(x_odd), atol=1e-6), \
        "odd-shape sigmoid mismatch"

    print("KERNEL_OK")
</pallas_src>

<mosaic_0001>
module attributes {stable_mosaic.version = 11 : i64} {
  func.func @_activation_kernel(%arg0: i32, %arg1: memref<1x2048xf32, #tpu.memory_space<vmem>>, %arg2: memref<1x2048xf32, #tpu.memory_space<vmem>>) attributes {dimension_semantics = [#tpu.dimension_semantics<parallel>], iteration_bounds = array<i64: 1>, scalar_prefetch = 0 : i64, scratch_operands = 0 : i64, tpu.core_type = #tpu.core_type<tc>, window_params = [{transform_indices = @transform_0, window_bounds = array<i64: 1, 2048>}, {transform_indices = @transform_1, window_bounds = array<i64: 1, 2048>}]} {
    %c0 = arith.constant 0 : index
    %c0_0 = arith.constant 0 : index
    %0 = vector.load %arg1[%c0, %c0_0] : memref<1x2048xf32, #tpu.memory_space<vmem>>, vector<1x2048xf32>
    %cst = arith.constant 0.000000e+00 : f32
    %1 = vector.broadcast %cst : f32 to vector<1x2048xf32>
    %2 = arith.maximumf %0, %1 : vector<1x2048xf32>
    %c0_1 = arith.constant 0 : index
    %c0_2 = arith.constant 0 : index
    %3 = vector.load %arg2[%c0_1, %c0_2] : memref<1x2048xf32, #tpu.memory_space<vmem>>, vector<1x2048xf32>
    tpu.vector_store %arg2[%c0_1, %c0_2], %2 {strides = array<i32>} : memref<1x2048xf32, #tpu.memory_space<vmem>>, vector<1x2048xf32>,
    return
  }
  func.func @transform_0(%arg0: i32) -> (i32, i32) {
    %c0_i32 = arith.constant 0 : i32
    %c0_i32_0 = arith.constant 0 : i32
    return %arg0, %c0_i32 : i32, i32
  }
  func.func @transform_1(%arg0: i32) -> (i32, i32) {
    %c0_i32 = arith.constant 0 : i32
    %c0_i32_0 = arith.constant 0 : i32
    return %arg0, %c0_i32 : i32, i32
  }
}

</mosaic_0001>

<llo_original>
// kernel: _conv_block_forward.1
$region0: #{_conv_block_forward.1}
  #allocation0 [shape = 'u32[]', space=smem, size = 0x4, offset = 0x4, fixed_abs, tag = 'smem constant byte address 0x4 - core index']
  #allocation1 [shape = 'u32[72,128]{1,0:T(1,128)}', space=vmem, size = 0x9000, scoped, tag = 'internal scratch']
  %s0 = inlined_call_operand.vmem [shape: f32[1,2048], index: 0, kind: input, shape index: {}]
  %s1 = inlined_call_operand.vmem [shape: f32[1,2048], index: 1, kind: output, shape index: {}]
  %s2 = sld [smem:[#allocation0]]
  $region14: #{_conv_block_forward.1} parent=0
    _
  %s4 = ssub.s32 1, %s2
  %s5 = scalar_select 0, %s4, %s2
  // Predicated region
  $region2: #{_conv_block_forward.1} parent=0 // pred_check
    _
  $region3: #{_conv_block_forward.1} parent=0 // pred_check_branch
    %7 = sbr.rel (0) target = $region5
  $region4: #{_conv_block_forward.1} parent=0 // pred_region
    _
  $region5: #{_conv_block_forward.1} parent=0 // pred_fallthru
    _
  %v8 = vld [vmem:[%s0] sm:$0xff]
  %v9 = vld [vmem:[%s0 + $0x8] sm:$0xff]
  %v10 = vmax.f32 %v8, 0.0
  %v11 = vmax.f32 %v9, 0.0
  %12 = vst [vmem:[%s1] sm:$0xff] %v10
  %13 = vst [vmem:[%s1 + $0x8] sm:$0xff] %v11
  // Predicated region
  $region6: #{_conv_block_forward.1} parent=0 // pred_check
    _
  $region7: #{_conv_block_forward.1} parent=0 // pred_check_branch
    %15 = sbr.rel (0) target = $region9
  $region8: #{_conv_block_forward.1} parent=0 // pred_region
    _
  $region9: #{_conv_block_forward.1} parent=0 // pred_fallthru
    _
  // Predicated region
  $region10: #{_conv_block_forward.1} parent=0 // pred_check
    _
  $region11: #{_conv_block_forward.1} parent=0 // pred_check_branch
    %17 = sbr.rel (0) target = $region13
  $region12: #{_conv_block_forward.1} parent=0 // pred_region
    _
  $region13: #{_conv_block_forward.1} parent=0 // pred_fallthru
    _

</llo_original>
